<compile_context>
chip_gen: v7x
topology: tpu7x:2x2x1
jax: 0.10.0
libtpu: 0.0.40
codegen_flags: <defaults>
</compile_context>

<pallas_src>
import functools

import jax
import jax.numpy as jnp
from jax import lax
from jax.experimental import pallas as pl
from jax.experimental.pallas import tpu as pltpu

E_LAMBDA = 1e-4


# ------------------------------- helpers ------------------------------------

def _align_up(x, m):
    return ((x + m - 1) // m) * m


def _cdiv(a, b):
    return (a + b - 1) // b


def _sublane(itemsize):
    # Packed-sublane alignment for the second-to-last block dim.
    return {1: 32, 2: 16}.get(itemsize, 8)


def _vmem_capacity_bytes():
    try:
        info = pltpu.get_tpu_info()
        cap = int(getattr(info, "vmem_capacity_bytes", 0))
        if cap > 0:
            return cap
    except Exception:
        pass
    return 64 << 20  # conservative (v7x-sized) default if the query fails


def _vmem_limit_bytes(vmem_cap):
    # Raise the scoped-VMEM cap so the enlarged double-buffered tiles fit,
    # while staying within physical VMEM on every generation (v7x: 64 MiB/TC).
    return int(min(96 << 20, vmem_cap * 3 // 4))


def _has_lowp_vpu():
    # v6e / v7x have a bf16 VPU + EUP; v5e and older do not.
    try:
        kind = jax.devices()[0].device_kind.lower()
    except Exception:
        return False
    return ("v6" in kind) or ("v7" in kind)


# ------------------------------ tile choosers --------------------------------

def _choose_row_tile(nc, hw, itemsize, vmem_cap):
    """Rows of (n, c) per grid step for the single-pass path, or None if even
    the minimal sublane-aligned tile would overflow the scoped VMEM limit."""
    sub = _sublane(itemsize)
    # Bytes per row in flight: double-buffered input + output blocks
    # (2 + 2 = 4 x itemsize) plus ~2 f32 temporaries (the f32 upcast and
    # (x - mu)^2) that live across the reduction barriers.
    per_row = hw * (4 * itemsize + 8)

    small_vmem = vmem_cap <= (64 << 20)            # v7x-class part (2 TCs)
    budget = (20 << 20) if small_vmem else (40 << 20)
    limit = _vmem_limit_bytes(vmem_cap)

    # Hard clamp: never emit a block whose working set overshoots the scoped
    # VMEM limit (keep ~12.5% headroom for Mosaic-internal scratch).
    hard_cap = ((limit - (limit >> 3)) // per_row // sub) * sub
    if hard_cap < sub:
        return None                                # -> hw-tiled two-pass path

    nc_al = _align_up(nc, sub)
    rows = (min(budget // per_row, hard_cap) // sub) * sub
    rows = min(max(rows, sub), nc_al)

    steps = _cdiv(nc_al, rows)
    if small_vmem:
        # v7x megacore: keep the step count even so both TCs get equal work.
        if steps == 1 and nc_al > sub:
            rows = _align_up(_cdiv(nc_al, 2), sub)
        elif steps > 1 and steps % 2:
            rows = _align_up(_cdiv(nc_al, steps + 1), sub)
    else:
        # Single-TC parts: keep >= 4 steps when the problem is big enough so
        # the BlockSpec DMA pipeline has iterations to overlap.
        if steps < 4 and (nc_al // 4) >= sub:
            rows = min(rows, (nc_al // 4 // sub) * sub)

    # Block shape equal to the full array dim is always legal, so never exceed nc.
    return max(1, min(rows, nc))


def _choose_two_pass_tiles(nc, hw, itemsize, vmem_cap):
    """Tiles for the hw-tiled two-pass fallback (only taken for huge H*W)."""
    sub = _sublane(itemsize)
    small_vmem = vmem_cap <= (64 << 20)
    budget = (20 << 20) if small_vmem else (40 << 20)
    row_tile = nc if nc < sub else sub
    per_elem = 4 * itemsize + 8
    hw_tile = (budget // (max(row_tile, 1) * per_elem) // 128) * 128
    hw_tile = max(128, min(hw_tile, max((hw // 128) * 128, 128)))
    return row_tile, hw_tile


# -------------------------------- kernels ------------------------------------

def _row_inv_denom(var, e_lambda):
    # 1 / (4 * (var + e_lambda)) per row on the EUP: approx seed + one Newton
    # step restores ~f32 accuracy without a per-element divide.
    denom = 4.0 * (var + e_lambda)
    inv = pl.reciprocal(denom, approx=True)
    return inv * (2.0 - denom * inv)


def _attn_apply_store(x_ref, o_ref, x32, d, inv, lowp_apply):
    # sigmoid(z) = 0.5 * tanh(0.5 * z) + 0.5; here z = d*inv + 0.5 >= 0.5, so
    # the single-EUP tanh form is safe (no stable-logistic expansion/selects).
    if lowp_apply:
        # Low-precision apply phase (v6e/v7x bf16 VPU/EUP): halves VALU work
        # and vreg pressure; the moments stay in f32.
        e_inv = (d * inv + 0.5).astype(o_ref.dtype)
        attn = 0.5 * jnp.tanh(0.5 * e_inv) + 0.5
        o_ref[...] = x_ref[...] * attn
    else:
        e_inv = d * inv + 0.5
        attn = 0.5 * jnp.tanh(0.5 * e_inv) + 0.5
        o_ref[...] = (x32 * attn).astype(o_ref.dtype)


def _simam_kernel(x_ref, o_ref, *, e_lambda, inv_nm1, lowp_apply):
    # Single-pass path: the whole H*W of each row is resident in the block.
    x32 = x_ref[...].astype(jnp.float32)
    inv_hw = 1.0 / x32.shape[-1]

    # Two-pass (centered) moments: the second XLU reduction hides completely
    # under the HBM DMA and avoids sum/sum-of-squares cancellation.
    mu = jnp.sum(x32, axis=-1, keepdims=True) * inv_hw
    d = (x32 - mu) ** 2
    var = jnp.sum(d, axis=-1, keepdims=True) * inv_nm1

    inv = _row_inv_denom(var, e_lambda)
    _attn_apply_store(x_ref, o_ref, x32, d, inv, lowp_apply)


def _simam_stats_kernel(x_ref, s1_ref, s2_ref, *, hw, hw_tile):
    # Pass 1 of the hw-tiled fallback: accumulate per-row sum / sum-of-squares.
    j = pl.program_id(1)

    @pl.when(j == 0)
    def _():
        s1_ref[...] = jnp.zeros_like(s1_ref)
        s2_ref[...] = jnp.zeros_like(s2_ref)

    x = x_ref[...].astype(jnp.float32)
    if hw % hw_tile:
        # Zero the padding lanes of the (partial) last hw tile before reducing.
        lane = lax.broadcasted_iota(jnp.int32, x.shape, 1)
        x = jnp.where(lane < (hw - j * hw_tile), x, 0.0)
    s1_ref[...] += jnp.sum(x, axis=-1, keepdims=True)
    s2_ref[...] += jnp.sum(x * x, axis=-1, keepdims=True)


def _simam_apply_kernel(x_ref, s1_ref, s2_ref, o_ref, *,
                        e_lambda, inv_hw, inv_nm1, lowp_apply):
    # Pass 2 of the hw-tiled fallback: apply the attention per hw tile.
    x32 = x_ref[...].astype(jnp.float32)
    s1 = s1_ref[...]
    mu = s1 * inv_hw
    # TODO(synk): the accumulated sum/sum-of-squares variance can cancel in
    # f32 for very large-mean activations; this path only runs when H*W is too
    # large for the centered single-pass form to be held resident in VMEM.
    var = (s2_ref[...] - s1 * mu) * inv_nm1
    inv = _row_inv_denom(var, e_lambda)
    d = (x32 - mu) ** 2
    _attn_apply_store(x_ref, o_ref, x32, d, inv, lowp_apply)


# ----------------------------- pallas wrappers -------------------------------

def _simam_single_pass(x2, e_lambda, row_tile, lowp_apply, vmem_limit):
    nc, hw = x2.shape
    kernel = functools.partial(_simam_kernel, e_lambda=e_lambda,
                               inv_nm1=1.0 / max(hw - 1, 1),   # H*W == 1 guard
                               lowp_apply=lowp_apply)
    return pl.pallas_call(
        kernel,
        out_shape=jax.ShapeDtypeStruct((nc, hw), x2.dtype),
        grid_spec=pltpu.PrefetchScalarGridSpec(
            num_scalar_prefetch=0,
            grid=(_cdiv(nc, row_tile),),
            in_specs=[pl.BlockSpec((row_tile, hw), lambda i: (i, 0))],
            out_specs=pl.BlockSpec((row_tile, hw), lambda i: (i, 0)),
        ),
        compiler_params=pltpu.CompilerParams(
            dimension_semantics=("parallel",),
            vmem_limit_bytes=vmem_limit,
        ),
    )(x2)


def _simam_two_pass(x2, e_lambda, row_tile, hw_tile, lowp_apply, vmem_limit):
    """hw-tiled fallback: stats kernel (accumulate over H*W tiles) + apply kernel."""
    nc, hw = x2.shape
    grid = (_cdiv(nc, row_tile), _cdiv(hw, hw_tile))

    s1, s2 = pl.pallas_call(
        functools.partial(_simam_stats_kernel, hw=hw, hw_tile=hw_tile),
        out_shape=(jax.ShapeDtypeStruct((nc, 1), jnp.float32),
                   jax.ShapeDtypeStruct((nc, 1), jnp.float32)),
        grid_spec=pltpu.PrefetchScalarGridSpec(
            num_scalar_prefetch=0,
            grid=grid,
            in_specs=[pl.BlockSpec((row_tile, hw_tile), lambda i, j: (i, j))],
            out_specs=[pl.BlockSpec((row_tile, 1), lambda i, j: (i, 0)),
                       pl.BlockSpec((row_tile, 1), lambda i, j: (i, 0))],
        ),
        compiler_params=pltpu.CompilerParams(
            dimension_semantics=("parallel", "arbitrary"),
            vmem_limit_bytes=vmem_limit,
        ),
    )(x2)

    apply_kernel = functools.partial(
        _simam_apply_kernel, e_lambda=e_lambda, inv_hw=1.0 / hw,
        inv_nm1=1.0 / max(hw - 1, 1), lowp_apply=lowp_apply)
    return pl.pallas_call(
        apply_kernel,
        out_shape=jax.ShapeDtypeStruct((nc, hw), x2.dtype),
        grid_spec=pltpu.PrefetchScalarGridSpec(
            num_scalar_prefetch=0,
            grid=grid,
            in_specs=[pl.BlockSpec((row_tile, hw_tile), lambda i, j: (i, j)),
                      pl.BlockSpec((row_tile, 1), lambda i, j: (i, 0)),
                      pl.BlockSpec((row_tile, 1), lambda i, j: (i, 0))],
            out_specs=pl.BlockSpec((row_tile, hw_tile), lambda i, j: (i, j)),
        ),
        compiler_params=pltpu.CompilerParams(
            dimension_semantics=("parallel", "parallel"),
            vmem_limit_bytes=vmem_limit,
        ),
    )(x2, s1, s2)


def simam_attention(x, e_lambda=E_LAMBDA):
    """x: (N, C, H, W). Returns y = x * sigmoid(e_inv), same shape/dtype."""
    N, C, H, W = x.shape
    nc, hw = N * C, H * W
    itemsize = jnp.dtype(x.dtype).itemsize

    vmem_cap = _vmem_capacity_bytes()
    vmem_limit = _vmem_limit_bytes(vmem_cap)
    lowp = (itemsize == 2) and _has_lowp_vpu()

    # TODO(synk): for hw < 128 (e.g. 7x7 / 14x14 CNN maps) every vector
    # load/store is lane-masked; packing 128 // hw maps per 128-lane row with
    # a segmented lane reduction would recover lane density.
    x2 = x.reshape(nc, hw)
    row_tile = _choose_row_tile(nc, hw, itemsize, vmem_cap)
    if row_tile is not None:
        y2 = _simam_single_pass(x2, e_lambda, row_tile, lowp, vmem_limit)
    else:
        rows, hw_tile = _choose_two_pass_tiles(nc, hw, itemsize, vmem_cap)
        y2 = _simam_two_pass(x2, e_lambda, rows, hw_tile, lowp, vmem_limit)
    return y2.reshape(N, C, H, W)


# ------------------------------- reference -----------------------------------

def _reference(x, e_lambda=E_LAMBDA):
    xf = x.astype(jnp.float32)
    n = x.shape[2] * x.shape[3] - 1
    mu = jnp.mean(xf, axis=(2, 3), keepdims=True)
    d = (xf - mu) ** 2
    v = jnp.sum(d, axis=(2, 3), keepdims=True) / n
    e_inv = d / (4.0 * (v + e_lambda)) + 0.5
    return xf * jax.nn.sigmoid(e_inv)


if __name__ == "__main__":
    key = jax.random.PRNGKey(0)
    k1, k2, k3 = jax.random.split(key, 3)

    # 1) Main (single-pass) path, f32.
    x = jax.random.normal(k1, (2, 4, 16, 16), dtype=jnp.float32)
    y = jax.block_until_ready(simam_attention(x))
    assert y.shape == x.shape and y.dtype == x.dtype
    assert jnp.allclose(y, _reference(x), atol=1e-4, rtol=1e-4), "single-pass mismatch"

    # 2) hw-tiled two-pass fallback, forced with small tiles so the hw
    #    accumulation and the partial-lane masking (hw=360 % 128 != 0) are
    #    exercised even though the shape is small.
    xb = jax.random.normal(k2, (2, 8, 12, 30), dtype=jnp.float32)
    vmem_cap = _vmem_capacity_bytes()
    yb2 = _simam_two_pass(xb.reshape(16, 360), E_LAMBDA, row_tile=8, hw_tile=128,
                          lowp_apply=False, vmem_limit=_vmem_limit_bytes(vmem_cap))
    yb = jax.block_until_ready(yb2).reshape(xb.shape)
    assert jnp.allclose(yb, _reference(xb), atol=1e-4, rtol=1e-4), "two-pass mismatch"

    # 3) bf16 input (low-precision apply on v6e/v7x, full-f32 path on v5e).
    xh = jax.random.normal(k3, (2, 8, 16, 16), dtype=jnp.float32).astype(jnp.bfloat16)
    yh = jax.block_until_ready(simam_attention(xh))
    assert yh.shape == xh.shape and yh.dtype == jnp.bfloat16
    assert jnp.allclose(yh.astype(jnp.float32), _reference(xh),
                        atol=5e-2, rtol=5e-2), "bf16 mismatch"

    print("KERNEL_OK")
</pallas_src>

<mosaic_0001>
module attributes {stable_mosaic.version = 11 : i64} {
  func.func @_simam_kernel(%arg0: i32, %arg1: memref<8x256xf32, #tpu.memory_space<vmem>>, %arg2: memref<8x256xf32, #tpu.memory_space<vmem>>) attributes {dimension_semantics = [#tpu.dimension_semantics<parallel>], iteration_bounds = array<i64: 1>, scalar_prefetch = 0 : i64, scratch_operands = 0 : i64, tpu.core_type = #tpu.core_type<tc>, window_params = [{transform_indices = @transform_0, window_bounds = array<i64: 8, 256>}, {transform_indices = @transform_1, window_bounds = array<i64: 8, 256>}]} {
    %c0 = arith.constant 0 : index
    %c0_0 = arith.constant 0 : index
    %0 = vector.load %arg1[%c0, %c0_0] : memref<8x256xf32, #tpu.memory_space<vmem>>, vector<8x256xf32>
    %cst = arith.constant dense<0.000000e+00> : vector<8xf32>
    %1 = vector.multi_reduction <add>, %0, %cst [1] : vector<8x256xf32> to vector<8xf32>
    %2 = vector.shape_cast %1 : vector<8xf32> to vector<8x1xf32>
    %cst_1 = arith.constant 3.906250e-03 : f32
    %3 = vector.broadcast %cst_1 : f32 to vector<8x1xf32>
    %4 = arith.mulf %2, %3 : vector<8x1xf32>
    %5 = vector.broadcast %4 : vector<8x1xf32> to vector<8x256xf32>
    %6 = arith.subf %0, %5 : vector<8x256xf32>
    %7 = arith.mulf %6, %6 : vector<8x256xf32>
    %cst_2 = arith.constant dense<0.000000e+00> : vector<8xf32>
    %8 = vector.multi_reduction <add>, %7, %cst_2 [1] : vector<8x256xf32> to vector<8xf32>
    %9 = vector.shape_cast %8 : vector<8xf32> to vector<8x1xf32>
    %cst_3 = arith.constant 0.00392156886 : f32
    %10 = vector.broadcast %cst_3 : f32 to vector<8x1xf32>
    %11 = arith.mulf %9, %10 : vector<8x1xf32>
    %cst_4 = arith.constant 9.99999974E-5 : f32
    %12 = vector.broadcast %cst_4 : f32 to vector<8x1xf32>
    %13 = arith.addf %11, %12 : vector<8x1xf32>
    %cst_5 = arith.constant 4.000000e+00 : f32
    %14 = vector.broadcast %cst_5 : f32 to vector<8x1xf32>
    %15 = arith.mulf %14, %13 : vector<8x1xf32>
    %16 = tpu.reciprocal %15 {approx = true} : vector<8x1xf32> -> vector<8x1xf32>
    %17 = arith.mulf %15, %16 : vector<8x1xf32>
    %cst_6 = arith.constant 2.000000e+00 : f32
    %18 = vector.broadcast %cst_6 : f32 to vector<8x1xf32>
    %19 = arith.subf %18, %17 : vector<8x1xf32>
    %20 = arith.mulf %16, %19 : vector<8x1xf32>
    %21 = vector.broadcast %20 : vector<8x1xf32> to vector<8x256xf32>
    %22 = arith.mulf %7, %21 : vector<8x256xf32>
    %cst_7 = arith.constant 5.000000e-01 : f32
    %23 = vector.broadcast %cst_7 : f32 to vector<8x256xf32>
    %24 = arith.addf %22, %23 : vector<8x256xf32>
    %cst_8 = arith.constant 5.000000e-01 : f32
    %25 = vector.broadcast %cst_8 : f32 to vector<8x256xf32>
    %26 = arith.mulf %25, %24 : vector<8x256xf32>
    %27 = math.tanh %26 : vector<8x256xf32>
    %cst_9 = arith.constant 5.000000e-01 : f32
    %28 = vector.broadcast %cst_9 : f32 to vector<8x256xf32>
    %29 = arith.mulf %28, %27 : vector<8x256xf32>
    %cst_10 = arith.constant 5.000000e-01 : f32
    %30 = vector.broadcast %cst_10 : f32 to vector<8x256xf32>
    %31 = arith.addf %29, %30 : vector<8x256xf32>
    %32 = arith.mulf %0, %31 : vector<8x256xf32>
    %c0_11 = arith.constant 0 : index
    %c0_12 = arith.constant 0 : index
    %33 = vector.load %arg2[%c0_11, %c0_12] : memref<8x256xf32, #tpu.memory_space<vmem>>, vector<8x256xf32>
    tpu.vector_store %arg2[%c0_11, %c0_12], %32 {strides = array<i32>} : memref<8x256xf32, #tpu.memory_space<vmem>>, vector<8x256xf32>,
    return
  }
  func.func @transform_0(%arg0: i32) -> (i32, i32) {
    %c0_i32 = arith.constant 0 : i32
    %c0_i32_0 = arith.constant 0 : i32
    return %arg0, %c0_i32 : i32, i32
  }
  func.func @transform_1(%arg0: i32) -> (i32, i32) {
    %c0_i32 = arith.constant 0 : i32
    %c0_i32_0 = arith.constant 0 : i32
    return %arg0, %c0_i32 : i32, i32
  }
}

</mosaic_0001>

<llo_original>
// kernel: tpu_custom_call.1
$region0: #{tpu_custom_call.1}
  #allocation0 [shape = 'u32[]', space=smem, size = 0x4, offset = 0x4, fixed_abs, tag = 'smem constant byte address 0x4 - core index']
  #allocation1 [shape = 'u32[144,128]{1,0:T(1,128)}', space=vmem, size = 0x12000, scoped, tag = 'internal scratch']
  %s0 = inlined_call_operand.hbm [shape: f32[8,256], index: 0, kind: input, shape index: {}]
  %s1 = inlined_call_operand.hbm [shape: f32[8,256], index: 1, kind: output, shape index: {}]
  %s2 = sld [smem:[#allocation0]]
  $region18: #{tpu_custom_call.1} parent=0
    _
  %s4 = ssub.s32 1, %s2
  %s5 = scalar_select 0, %s4, %s2
  $region1: #{tpu_custom_call.1} parent=0
    #allocation2 [shape = 'u8[8192]{0}', space=vmem, size = 0x2000, scoped, tag = 'input window, operand 0, single buffered']
    #allocation3 [shape = 's32[1]{0}', space=sflag, size = 0x4, scoped, tag = 'scoped memory for tpu_custom_call.1']
    #allocation4 [shape = 's32[1]{0}', space=sflag, size = 0x4, scoped, tag = 'scoped memory for tpu_custom_call.1']
    #allocation5 [shape = 'u8[8192]{0}', space=vmem, size = 0x2000, scoped, tag = 'output window, operand 0, single buffered']
    %6 = vsyncpa [#allocation3], 0
    %7 = vsyncpa [#allocation4], 0
    // Predicated region
    $region2: #{tpu_custom_call.1} parent=1 // pred_check
      _
    $region3: #{tpu_custom_call.1} parent=1 // pred_check_branch
      %9 = sbr.rel (0) target = $region5
    $region4: #{tpu_custom_call.1} parent=1 // pred_region
      %s11 = ssub.s32 256, 256
      %12 = vsyncadd [#allocation3], %s11
      %s14 = sshll.u32 [#allocation2], 4
      %s15 = int_to_ptr.vmem [resolvable:$true] %s14
      %17 = dma.hbm_to_vmem [thread:$0]  %s0, 256, %s15, [#allocation3]
    $region5: #{tpu_custom_call.1} parent=1 // pred_fallthru
      _
    // Predicated region
    $region6: #{tpu_custom_call.1} parent=1 // pred_check
      _
    $region7: #{tpu_custom_call.1} parent=1 // pred_check_branch
      %19 = sbr.rel (0) target = $region9
    $region8: #{tpu_custom_call.1} parent=1 // pred_region
      %20 = dma.done [#allocation3], 256
    $region9: #{tpu_custom_call.1} parent=1 // pred_fallthru
      _
    %v21 = vld [vmem:[#allocation2] sm:$0xff]
    %v22 = vld [vmem:[#allocation2 + $0x8] sm:$0xff]
    %v23 = vadd.f32 %v21, %v22
    %24 = vadd.xlane.f32.xlu0 %v23
    %v25 = vpop.xlane.xlu0 %24
    %v26 = vmul.f32 %v25, 0.00390625
    %v27 = vsub.f32 %v21, %v26
    %v28 = vsub.f32 %v22, %v26
    %v29 = vmul.f32 %v27, %v27
    %v30 = vmul.f32 %v28, %v28
    %v31 = vadd.f32 %v29, %v30
    %32 = vadd.xlane.f32.xlu0 %v31
    %v33 = vpop.xlane.xlu0 %32
    %v34 = vmul.f32 %v33, 0.003921569
    %v35 = vadd.f32 %v34, 0.0001
    %v36 = vmul.f32 %v35, 4.0
    %v37 = vrcp.pop %v36
    %v38 = vmul.f32 %v36, %v37
    %v39 = vsub.f32 2.0, %v38
    %v40 = vmul.f32 %v37, %v39
    %v41 = vmul.f32 %v29, %v40
    %v42 = vmul.f32 %v30, %v40
    %v43 = vadd.f32 %v41, 0.5
    %v44 = vadd.f32 %v42, 0.5
    %v45 = vmul.f32 %v43, 0.5
    %v46 = vmul.f32 %v44, 0.5
    %v47 = vtanh.pop %v45
    %v48 = vtanh.pop %v46
    %v49 = vmul.f32 %v47, 0.5
    %v50 = vmul.f32 %v48, 0.5
    %v51 = vadd.f32 %v49, 0.5
    %v52 = vadd.f32 %v50, 0.5
    %v53 = vmul.f32 %v21, %v51
    %v54 = vmul.f32 %v22, %v52
    %55 = vst [vmem:[#allocation5] sm:$0xff] %v53
    %56 = vst [vmem:[#allocation5 + $0x8] sm:$0xff] %v54
    // Predicated region
    $region10: #{tpu_custom_call.1} parent=1 // pred_check
      _
    $region11: #{tpu_custom_call.1} parent=1 // pred_check_branch
      %58 = sbr.rel (0) target = $region13
    $region12: #{tpu_custom_call.1} parent=1 // pred_region
      %s60 = ssub.s32 256, 256
      %61 = vsyncadd [#allocation4], %s60
      %s63 = sshll.u32 [#allocation5], 4
      %s64 = int_to_ptr.vmem [resolvable:$true] %s63
      %66 = dma.vmem_to_hbm [thread:$0]  %s64, 256, %s1, [#allocation4]
    $region13: #{tpu_custom_call.1} parent=1 // pred_fallthru
      _
    // Predicated region
    $region14: #{tpu_custom_call.1} parent=1 // pred_check
      _
    $region15: #{tpu_custom_call.1} parent=1 // pred_check_branch
      %68 = sbr.rel (0) target = $region17
    $region16: #{tpu_custom_call.1} parent=1 // pred_region
      %69 = dma.done [#allocation4], 256
    $region17: #{tpu_custom_call.1} parent=1 // pred_fallthru
      _
    %70 = vsyncpa [#allocation3], 1
    %71 = vsyncpa [#allocation4], 1

</llo_original>
